<compile_context>
chip_gen: v7x
topology: tpu7x:2x2x1
jax: 0.10.0
libtpu: 0.0.40
codegen_flags: <defaults>
</compile_context>

<pallas_src>
import jax
import jax.numpy as jnp
from jax.experimental import pallas as pl
from jax.experimental.pallas import tpu as pltpu


# ----------------------------------------------------------------------------
# Fused kernel: conv3x3(im2col matmul)+bias+ReLU -> MXU pooling -> fused projections
# ----------------------------------------------------------------------------
def _fused_forward_kernel(patches_ref, wc_ref, bc_ref, pool_img_ref,
                          emb_ref, pool_txt_ref,
                          w_img_ref, w_txt_ref, b_cat_ref, out_ref):
    # ---- image tower: 3x3 conv as im2col matmul + bias + ReLU ----
    conv = jnp.dot(patches_ref[...], wc_ref[...],
                   preferred_element_type=jnp.float32) + bc_ref[...]
    conv = jnp.maximum(conv, 0.0)                                   # [M, C_hid]

    # ---- global average pool as an MXU matmul (per-batch averaging matrix) ----
    pooled_img = jnp.dot(pool_img_ref[...], conv,
                         preferred_element_type=jnp.float32)        # [B, C_hid]

    # ---- text tower: masked-mean pool as an MXU matmul ----
    pooled_txt = jnp.dot(pool_txt_ref[...], emb_ref[...],
                         preferred_element_type=jnp.float32)        # [B, E]

    # ---- fused projections: one lane-dense [B, 128] output (online|target|text|pad)
    out_ref[...] = (
        jnp.dot(pooled_img, w_img_ref[...], preferred_element_type=jnp.float32)
        + jnp.dot(pooled_txt, w_txt_ref[...], preferred_element_type=jnp.float32)
        + b_cat_ref[...]
    )


def make_params(key, c_in=4, c_hid=8, proj_dim=32, vocab=64, embed_dim=32):
    ks = jax.random.split(key, 7)
    return {
        "conv_w": jax.random.normal(ks[0], (c_hid, c_in, 3, 3), jnp.float32) * 0.1,
        "conv_b": jnp.zeros((c_hid,), jnp.float32),
        "w_online": jax.random.normal(ks[1], (c_hid, proj_dim), jnp.float32) * 0.1,
        "b_online": jax.random.normal(ks[2], (proj_dim,), jnp.float32) * 0.01,
        # target head = separate (EMA-style) copy of the projection weights
        "w_target": jax.random.normal(ks[3], (c_hid, proj_dim), jnp.float32) * 0.1,
        "b_target": jax.random.normal(ks[4], (proj_dim,), jnp.float32) * 0.01,
        "embed": jax.random.normal(ks[5], (vocab, embed_dim), jnp.float32) * 0.1,
        "w_text": jax.random.normal(ks[6], (embed_dim, proj_dim), jnp.float32) * 0.1,
        "b_text": jnp.zeros((proj_dim,), jnp.float32),
    }


@jax.jit
def combined_model_forward(params, images, input_ids, attention_mask):
    B, C, H, W = images.shape
    HW = H * W
    M = B * HW
    C_hid = params["conv_w"].shape[0]
    D = params["w_online"].shape[1]
    E = params["embed"].shape[1]
    S = input_ids.shape[1]
    K = C * 9

    # lane-dense output width: round 3*D up to a multiple of 128
    OUT_W = ((3 * D + 127) // 128) * 128

    # --- im2col glue (plain JAX): pad=1, stride=1 ---
    # TODO(synk): at production sizes, do the im2col in-kernel as 9 shifted
    # matmuls on a VMEM-resident activation tile and tile M with a "parallel"
    # grid axis.
    xp = jnp.pad(images, ((0, 0), (0, 0), (1, 1), (1, 1)))
    patches = jnp.stack(
        [xp[:, :, i:i + H, j:j + W] for i in range(3) for j in range(3)], axis=-1
    )                                                         # [B, C, H, W, 9]
    patches = jnp.transpose(patches, (0, 2, 3, 1, 4)).reshape(M, K)
    wc = params["conv_w"].reshape(C_hid, K).T                 # [K, C_hid]
    bc = params["conv_b"].reshape(1, C_hid)

    # per-batch global-average-pool matrix: [B, M], row b has 1/HW on its block
    pool_img = jnp.kron(jnp.eye(B, dtype=jnp.float32),
                        jnp.full((1, HW), 1.0 / HW, jnp.float32))

    # --- text glue ---
    # TODO(synk): embedding gather stays in plain JAX (data-dependent gather).
    emb = jnp.take(params["embed"], input_ids, axis=0).reshape(B * S, E)
    maskf = attention_mask.astype(jnp.float32)                # [B, S]
    denom = jnp.maximum(jnp.sum(maskf, axis=1, keepdims=True), 1e-9)
    # block-diagonal masked-mean pooling matrix: [B, B*S]
    pool_txt = (jnp.eye(B, dtype=jnp.float32)[:, :, None]
                * (maskf / denom)[None, :, :]).reshape(B, B * S)

    # fused projection weights -> output columns are [online | target | text | pad]
    pad_w = OUT_W - 3 * D
    w_img_cat = jnp.concatenate(
        [params["w_online"], params["w_target"],
         jnp.zeros((C_hid, D + pad_w), jnp.float32)], axis=1)        # [C_hid, OUT_W]
    w_txt_cat = jnp.concatenate(
        [jnp.zeros((E, 2 * D), jnp.float32), params["w_text"],
         jnp.zeros((E, pad_w), jnp.float32)], axis=1)                # [E, OUT_W]
    b_cat = jnp.concatenate(
        [params["b_online"], params["b_target"], params["b_text"],
         jnp.zeros((pad_w,), jnp.float32)]).reshape(1, OUT_W)

    out = pl.pallas_call(
        _fused_forward_kernel,
        out_shape=jax.ShapeDtypeStruct((B, OUT_W), jnp.float32),
        grid=(1,),
        in_specs=[
            pl.BlockSpec((M, K), lambda i: (0, 0)),
            pl.BlockSpec((K, C_hid), lambda i: (0, 0)),
            pl.BlockSpec((1, C_hid), lambda i: (0, 0)),
            pl.BlockSpec((B, M), lambda i: (0, 0)),
            pl.BlockSpec((B * S, E), lambda i: (0, 0)),
            pl.BlockSpec((B, B * S), lambda i: (0, 0)),
            pl.BlockSpec((C_hid, OUT_W), lambda i: (0, 0)),
            pl.BlockSpec((E, OUT_W), lambda i: (0, 0)),
            pl.BlockSpec((1, OUT_W), lambda i: (0, 0)),
        ],
        out_specs=pl.BlockSpec((B, OUT_W), lambda i: (0, 0)),
        compiler_params=pltpu.CompilerParams(
            dimension_semantics=("arbitrary",)),
    )(patches, wc, bc, pool_img, emb, pool_txt, w_img_cat, w_txt_cat, b_cat)

    online = out[:, :D]
    target = out[:, D:2 * D]
    text_features = out[:, 2 * D:3 * D]
    return online, target, text_features


# ----------------------------------------------------------------------------
# Pure-JAX reference (for a correctness sanity check)
# ----------------------------------------------------------------------------
def reference_forward(params, images, input_ids, attention_mask):
    conv = jax.lax.conv_general_dilated(
        images, params["conv_w"], window_strides=(1, 1), padding="SAME",
        dimension_numbers=("NCHW", "OIHW", "NCHW"))
    conv = jax.nn.relu(conv + params["conv_b"].reshape(1, -1, 1, 1))
    pooled = conv.mean(axis=(2, 3))
    online = pooled @ params["w_online"] + params["b_online"]
    target = pooled @ params["w_target"] + params["b_target"]
    emb = jnp.take(params["embed"], input_ids, axis=0)
    m = attention_mask.astype(jnp.float32)[:, :, None]
    pooled_t = (emb * m).sum(1) / jnp.maximum(m.sum(1), 1e-9)
    text = pooled_t @ params["w_text"] + params["b_text"]
    return online, target, text


if __name__ == "__main__":
    key = jax.random.PRNGKey(0)
    k_img, k_ids, k_par = jax.random.split(key, 3)

    B, C, H, W = 2, 4, 16, 16
    S, VOCAB = 8, 64

    images = jax.random.normal(k_img, (B, C, H, W), jnp.float32)
    input_ids = jax.random.randint(k_ids, (B, S), 0, VOCAB, jnp.int32)
    attention_mask = jnp.array(
        [[1, 1, 1, 1, 1, 1, 0, 0],
         [1, 1, 1, 1, 0, 0, 0, 0]], dtype=jnp.int32
    )

    params = make_params(k_par, c_in=C)

    online, target, text_features = combined_model_forward(
        params, images, input_ids, attention_mask
    )
    jax.block_until_ready((online, target, text_features))

    assert online.shape == (B, 32)
    assert target.shape == (B, 32)
    assert text_features.shape == (B, 32)

    r_on, r_tg, r_tx = reference_forward(params, images, input_ids, attention_mask)
    assert jnp.allclose(online, r_on, rtol=1e-3, atol=1e-3)
    assert jnp.allclose(target, r_tg, rtol=1e-3, atol=1e-3)
    assert jnp.allclose(text_features, r_tx, rtol=1e-3, atol=1e-3)

    print("KERNEL_OK")
</pallas_src>

<mosaic_0001>
module attributes {stable_mosaic.version = 11 : i64} {
  func.func @_fused_forward_kernel(%arg0: i32, %arg1: memref<512x36xf32, #tpu.memory_space<vmem>>, %arg2: memref<36x8xf32, #tpu.memory_space<vmem>>, %arg3: memref<1x8xf32, #tpu.memory_space<vmem>>, %arg4: memref<2x512xf32, #tpu.memory_space<vmem>>, %arg5: memref<16x32xf32, #tpu.memory_space<vmem>>, %arg6: memref<2x16xf32, #tpu.memory_space<vmem>>, %arg7: memref<8x128xf32, #tpu.memory_space<vmem>>, %arg8: memref<32x128xf32, #tpu.memory_space<vmem>>, %arg9: memref<1x128xf32, #tpu.memory_space<vmem>>, %arg10: memref<2x128xf32, #tpu.memory_space<vmem>>) attributes {dimension_semantics = [#tpu.dimension_semantics<arbitrary>], iteration_bounds = array<i64: 1>, scalar_prefetch = 0 : i64, scratch_operands = 0 : i64, tpu.core_type = #tpu.core_type<tc>, window_params = [{pipeline_mode = #tpu.pipeline_mode<synchronous>, transform_indices = @transform_0, window_bounds = array<i64: 512, 36>}, {pipeline_mode = #tpu.pipeline_mode<synchronous>, transform_indices = @transform_1, window_bounds = array<i64: 36, 8>}, {pipeline_mode = #tpu.pipeline_mode<synchronous>, transform_indices = @transform_2, window_bounds = array<i64: 1, 8>}, {pipeline_mode = #tpu.pipeline_mode<synchronous>, transform_indices = @transform_3, window_bounds = array<i64: 2, 512>}, {pipeline_mode = #tpu.pipeline_mode<synchronous>, transform_indices = @transform_4, window_bounds = array<i64: 16, 32>}, {pipeline_mode = #tpu.pipeline_mode<synchronous>, transform_indices = @transform_5, window_bounds = array<i64: 2, 16>}, {pipeline_mode = #tpu.pipeline_mode<synchronous>, transform_indices = @transform_6, window_bounds = array<i64: 8, 128>}, {pipeline_mode = #tpu.pipeline_mode<synchronous>, transform_indices = @transform_7, window_bounds = array<i64: 32, 128>}, {pipeline_mode = #tpu.pipeline_mode<synchronous>, transform_indices = @transform_8, window_bounds = array<i64: 1, 128>}, {pipeline_mode = #tpu.pipeline_mode<synchronous>, transform_indices = @transform_9, window_bounds = array<i64: 2, 128>}]} {
    %c0 = arith.constant 0 : index
    %c0_0 = arith.constant 0 : index
    %0 = vector.load %arg1[%c0, %c0_0] : memref<512x36xf32, #tpu.memory_space<vmem>>, vector<512x36xf32>
    %c0_1 = arith.constant 0 : index
    %c0_2 = arith.constant 0 : index
    %1 = vector.load %arg2[%c0_1, %c0_2] : memref<36x8xf32, #tpu.memory_space<vmem>>, vector<36x8xf32>
    %cst = arith.constant dense<0.000000e+00> : vector<512x8xf32>
    %2 = tpu.matmul %0, %1, %cst {dimension_numbers = #tpu.dot_dimension_numbers<[1], [0], [0], [1], [0, 0, 1, 1], [], []>} : vector<512x36xf32>, vector<36x8xf32>, vector<512x8xf32> -> vector<512x8xf32>
    %c0_3 = arith.constant 0 : index
    %c0_4 = arith.constant 0 : index
    %3 = vector.load %arg3[%c0_3, %c0_4] : memref<1x8xf32, #tpu.memory_space<vmem>>, vector<1x8xf32>
    %4 = vector.broadcast %3 : vector<1x8xf32> to vector<512x8xf32>
    %5 = arith.addf %2, %4 : vector<512x8xf32>
    %cst_5 = arith.constant 0.000000e+00 : f32
    %6 = vector.broadcast %cst_5 : f32 to vector<512x8xf32>
    %7 = arith.maximumf %5, %6 : vector<512x8xf32>
    %c0_6 = arith.constant 0 : index
    %c0_7 = arith.constant 0 : index
    %8 = vector.load %arg4[%c0_6, %c0_7] : memref<2x512xf32, #tpu.memory_space<vmem>>, vector<2x512xf32>
    %cst_8 = arith.constant dense<0.000000e+00> : vector<2x8xf32>
    %9 = tpu.matmul %8, %7, %cst_8 {dimension_numbers = #tpu.dot_dimension_numbers<[1], [0], [0], [1], [0, 0, 1, 1], [], []>} : vector<2x512xf32>, vector<512x8xf32>, vector<2x8xf32> -> vector<2x8xf32>
    %c0_9 = arith.constant 0 : index
    %c0_10 = arith.constant 0 : index
    %10 = vector.load %arg6[%c0_9, %c0_10] : memref<2x16xf32, #tpu.memory_space<vmem>>, vector<2x16xf32>
    %c0_11 = arith.constant 0 : index
    %c0_12 = arith.constant 0 : index
    %11 = vector.load %arg5[%c0_11, %c0_12] : memref<16x32xf32, #tpu.memory_space<vmem>>, vector<16x32xf32>
    %cst_13 = arith.constant dense<0.000000e+00> : vector<2x32xf32>
    %12 = tpu.matmul %10, %11, %cst_13 {dimension_numbers = #tpu.dot_dimension_numbers<[1], [0], [0], [1], [0, 0, 1, 1], [], []>} : vector<2x16xf32>, vector<16x32xf32>, vector<2x32xf32> -> vector<2x32xf32>
    %c0_14 = arith.constant 0 : index
    %c0_15 = arith.constant 0 : index
    %13 = vector.load %arg7[%c0_14, %c0_15] : memref<8x128xf32, #tpu.memory_space<vmem>>, vector<8x128xf32>
    %cst_16 = arith.constant dense<0.000000e+00> : vector<2x128xf32>
    %14 = tpu.matmul %9, %13, %cst_16 {dimension_numbers = #tpu.dot_dimension_numbers<[1], [0], [0], [1], [0, 0, 1, 1], [], []>} : vector<2x8xf32>, vector<8x128xf32>, vector<2x128xf32> -> vector<2x128xf32>
    %c0_17 = arith.constant 0 : index
    %c0_18 = arith.constant 0 : index
    %15 = vector.load %arg8[%c0_17, %c0_18] : memref<32x128xf32, #tpu.memory_space<vmem>>, vector<32x128xf32>
    %cst_19 = arith.constant dense<0.000000e+00> : vector<2x128xf32>
    %16 = tpu.matmul %12, %15, %cst_19 {dimension_numbers = #tpu.dot_dimension_numbers<[1], [0], [0], [1], [0, 0, 1, 1], [], []>} : vector<2x32xf32>, vector<32x128xf32>, vector<2x128xf32> -> vector<2x128xf32>
    %17 = arith.addf %14, %16 : vector<2x128xf32>
    %c0_20 = arith.constant 0 : index
    %c0_21 = arith.constant 0 : index
    %18 = vector.load %arg9[%c0_20, %c0_21] : memref<1x128xf32, #tpu.memory_space<vmem>>, vector<1x128xf32>
    %19 = vector.broadcast %18 : vector<1x128xf32> to vector<2x128xf32>
    %20 = arith.addf %17, %19 : vector<2x128xf32>
    %c0_22 = arith.constant 0 : index
    %c0_23 = arith.constant 0 : index
    %21 = vector.load %arg10[%c0_22, %c0_23] : memref<2x128xf32, #tpu.memory_space<vmem>>, vector<2x128xf32>
    tpu.vector_store %arg10[%c0_22, %c0_23], %20 {strides = array<i32>} : memref<2x128xf32, #tpu.memory_space<vmem>>, vector<2x128xf32>,
    return
  }
  func.func @transform_0(%arg0: i32) -> (i32, i32) {
    %c0_i32 = arith.constant 0 : i32
    %c0_i32_0 = arith.constant 0 : i32
    %c0_i32_1 = arith.constant 0 : i32
    return %c0_i32, %c0_i32_0 : i32, i32
  }
  func.func @transform_1(%arg0: i32) -> (i32, i32) {
    %c0_i32 = arith.constant 0 : i32
    %c0_i32_0 = arith.constant 0 : i32
    %c0_i32_1 = arith.constant 0 : i32
    return %c0_i32, %c0_i32_0 : i32, i32
  }
  func.func @transform_2(%arg0: i32) -> (i32, i32) {
    %c0_i32 = arith.constant 0 : i32
    %c0_i32_0 = arith.constant 0 : i32
    %c0_i32_1 = arith.constant 0 : i32
    return %c0_i32, %c0_i32_0 : i32, i32
  }
  func.func @transform_3(%arg0: i32) -> (i32, i32) {
    %c0_i32 = arith.constant 0 : i32
    %c0_i32_0 = arith.constant 0 : i32
    %c0_i32_1 = arith.constant 0 : i32
    return %c0_i32, %c0_i32_0 : i32, i32
  }
  func.func @transform_4(%arg0: i32) -> (i32, i32) {
    %c0_i32 = arith.constant 0 : i32
    %c0_i32_0 = arith.constant 0 : i32
    %c0_i32_1 = arith.constant 0 : i32
    return %c0_i32, %c0_i32_0 : i32, i32
  }
  func.func @transform_5(%arg0: i32) -> (i32, i32) {
    %c0_i32 = arith.constant 0 : i32
    %c0_i32_0 = arith.constant 0 : i32
    %c0_i32_1 = arith.constant 0 : i32
    return %c0_i32, %c0_i32_0 : i32, i32
  }
  func.func @transform_6(%arg0: i32) -> (i32, i32) {
    %c0_i32 = arith.constant 0 : i32
    %c0_i32_0 = arith.constant 0 : i32
    %c0_i32_1 = arith.constant 0 : i32
    return %c0_i32, %c0_i32_0 : i32, i32
  }
  func.func @transform_7(%arg0: i32) -> (i32, i32) {
    %c0_i32 = arith.constant 0 : i32
    %c0_i32_0 = arith.constant 0 : i32
    %c0_i32_1 = arith.constant 0 : i32
    return %c0_i32, %c0_i32_0 : i32, i32
  }
  func.func @transform_8(%arg0: i32) -> (i32, i32) {
    %c0_i32 = arith.constant 0 : i32
    %c0_i32_0 = arith.constant 0 : i32
    %c0_i32_1 = arith.constant 0 : i32
    return %c0_i32, %c0_i32_0 : i32, i32
  }
  func.func @transform_9(%arg0: i32) -> (i32, i32) {
    %c0_i32 = arith.constant 0 : i32
    %c0_i32_0 = arith.constant 0 : i32
    %c0_i32_1 = arith.constant 0 : i32
    return %c0_i32, %c0_i32_0 : i32, i32
  }
}

</mosaic_0001>

<llo_original>
// kernel: combined_model_forward.1
$region0: #{combined_model_forward.1}
  #allocation0 [shape = 'u32[]', space=smem, size = 0x4, offset = 0x4, fixed_abs, tag = 'smem constant byte address 0x4 - core index']
  #allocation1 [shape = 'u32[144,128]{1,0:T(1,128)}', space=vmem, size = 0x12000, scoped, tag = 'internal scratch']
  %s0 = inlined_call_operand.vmem [shape: f32[512,36], index: 0, kind: input, shape index: {}]
  %s1 = inlined_call_operand.vmem [shape: f32[36,8], index: 1, kind: input, shape index: {}]
  %s2 = inlined_call_operand.vmem [shape: f32[1,8], index: 2, kind: input, shape index: {}]
  %s3 = inlined_call_operand.vmem [shape: f32[2,512], index: 3, kind: input, shape index: {}]
  %s4 = inlined_call_operand.vmem [shape: f32[16,32], index: 4, kind: input, shape index: {}]
  %s5 = inlined_call_operand.vmem [shape: f32[2,16], index: 5, kind: input, shape index: {}]
  %s6 = inlined_call_operand.vmem [shape: f32[8,128], index: 6, kind: input, shape index: {}]
  %s7 = inlined_call_operand.vmem [shape: f32[32,128], index: 7, kind: input, shape index: {}]
  %s8 = inlined_call_operand.vmem [shape: f32[1,128], index: 8, kind: input, shape index: {}]
  %s9 = inlined_call_operand.vmem [shape: f32[2,128], index: 9, kind: output, shape index: {}]
  %s10 = sld [smem:[#allocation0]]
  $region46: #{combined_model_forward.1} parent=0
    _
  %s12 = ssub.s32 1, %s10
  %s13 = scalar_select 0, %s12, %s10
  // Predicated region
  $region2: #{combined_model_forward.1} parent=0 // pred_check
    _
  $region3: #{combined_model_forward.1} parent=0 // pred_check_branch
    %15 = sbr.rel (0) target = $region5
  $region4: #{combined_model_forward.1} parent=0 // pred_region
    _
  $region5: #{combined_model_forward.1} parent=0 // pred_fallthru
    _
  // Predicated region
  $region6: #{combined_model_forward.1} parent=0 // pred_check
    _
  $region7: #{combined_model_forward.1} parent=0 // pred_check_branch
    %17 = sbr.rel (0) target = $region9
  $region8: #{combined_model_forward.1} parent=0 // pred_region
    _
  $region9: #{combined_model_forward.1} parent=0 // pred_fallthru
    _
  // Predicated region
  $region10: #{combined_model_forward.1} parent=0 // pred_check
    _
  $region11: #{combined_model_forward.1} parent=0 // pred_check_branch
    %19 = sbr.rel (0) target = $region13
  $region12: #{combined_model_forward.1} parent=0 // pred_region
    _
  $region13: #{combined_model_forward.1} parent=0 // pred_fallthru
    _
  // Predicated region
  $region14: #{combined_model_forward.1} parent=0 // pred_check
    _
  $region15: #{combined_model_forward.1} parent=0 // pred_check_branch
    %21 = sbr.rel (0) target = $region17
  $region16: #{combined_model_forward.1} parent=0 // pred_region
    _
  $region17: #{combined_model_forward.1} parent=0 // pred_fallthru
    _
  // Predicated region
  $region18: #{combined_model_forward.1} parent=0 // pred_check
    _
  $region19: #{combined_model_forward.1} parent=0 // pred_check_branch
    %23 = sbr.rel (0) target = $region21
  $region20: #{combined_model_forward.1} parent=0 // pred_region
    _
  $region21: #{combined_model_forward.1} parent=0 // pred_fallthru
    _
  // Predicated region
  $region22: #{combined_model_forward.1} parent=0 // pred_check
    _
  $region23: #{combined_model_forward.1} parent=0 // pred_check_branch
    %25 = sbr.rel (0) target = $region25
  $region24: #{combined_model_forward.1} parent=0 // pred_region
    _
  $region25: #{combined_model_forward.1} parent=0 // pred_fallthru
    _
  // Predicated region
  $region26: #{combined_model_forward.1} parent=0 // pred_check
    _
  $region27: #{combined_model_forward.1} parent=0 // pred_check_branch
    %27 = sbr.rel (0) target = $region29
  $region28: #{combined_model_forward.1} parent=0 // pred_region
    _
  $region29: #{combined_model_forward.1} parent=0 // pred_fallthru
    _
  // Predicated region
  $region30: #{combined_model_forward.1} parent=0 // pred_check
    _
  $region31: #{combined_model_forward.1} parent=0 // pred_check_branch
    %29 = sbr.rel (0) target = $region33
  $region32: #{combined_model_forward.1} parent=0 // pred_region
    _
  $region33: #{combined_model_forward.1} parent=0 // pred_fallthru
    _
  // Predicated region
  $region34: #{combined_model_forward.1} parent=0 // pred_check
    _
  $region35: #{combined_model_forward.1} parent=0 // pred_check_branch
    %31 = sbr.rel (0) target = $region37
  $region36: #{combined_model_forward.1} parent=0 // pred_region
    _
  $region37: #{combined_model_forward.1} parent=0 // pred_fallthru
    _
  %v32 = vld [vmem:[%s0] sm:$0xff]
  %v33 = vld [vmem:[%s0 + $0x8] sm:$0xff]
  %v34 = vld [vmem:[%s0 + $0x10] sm:$0xff]
  %v35 = vld [vmem:[%s0 + $0x18] sm:$0xff]
  %v36 = vld [vmem:[%s0 + $0x20] sm:$0xff]
  %v37 = vld [vmem:[%s0 + $0x28] sm:$0xff]
  %v38 = vld [vmem:[%s0 + $0x30] sm:$0xff]
  %v39 = vld [vmem:[%s0 + $0x38] sm:$0xff]
  %v40 = vld [vmem:[%s0 + $0x40] sm:$0xff]
  %v41 = vld [vmem:[%s0 + $0x48] sm:$0xff]
  %v42 = vld [vmem:[%s0 + $0x50] sm:$0xff]
  %v43 = vld [vmem:[%s0 + $0x58] sm:$0xff]
  %v44 = vld [vmem:[%s0 + $0x60] sm:$0xff]
  %v45 = vld [vmem:[%s0 + $0x68] sm:$0xff]
  %v46 = vld [vmem:[%s0 + $0x70] sm:$0xff]
  %v47 = vld [vmem:[%s0 + $0x78] sm:$0xff]
  %v48 = vld [vmem:[%s0 + $0x80] sm:$0xff]
  %v49 = vld [vmem:[%s0 + $0x88] sm:$0xff]
  %v50 = vld [vmem:[%s0 + $0x90] sm:$0xff]
  %v51 = vld [vmem:[%s0 + $0x98] sm:$0xff]
  %v52 = vld [vmem:[%s0 + $0xa0] sm:$0xff]
  %v53 = vld [vmem:[%s0 + $0xa8] sm:$0xff]
  %v54 = vld [vmem:[%s0 + $0xb0] sm:$0xff]
  %v55 = vld [vmem:[%s0 + $0xb8] sm:$0xff]
  %v56 = vld [vmem:[%s0 + $0xc0] sm:$0xff]
  %v57 = vld [vmem:[%s0 + $0xc8] sm:$0xff]
  %v58 = vld [vmem:[%s0 + $0xd0] sm:$0xff]
  %v59 = vld [vmem:[%s0 + $0xd8] sm:$0xff]
  %v60 = vld [vmem:[%s0 + $0xe0] sm:$0xff]
  %v61 = vld [vmem:[%s0 + $0xe8] sm:$0xff]
  %v62 = vld [vmem:[%s0 + $0xf0] sm:$0xff]
  %v63 = vld [vmem:[%s0 + $0xf8] sm:$0xff]
  %v64 = vld [vmem:[%s0 + $0x100] sm:$0xff]
  %v65 = vld [vmem:[%s0 + $0x108] sm:$0xff]
  %v66 = vld [vmem:[%s0 + $0x110] sm:$0xff]
  %v67 = vld [vmem:[%s0 + $0x118] sm:$0xff]
  %v68 = vld [vmem:[%s0 + $0x120] sm:$0xff]
  %v69 = vld [vmem:[%s0 + $0x128] sm:$0xff]
  %v70 = vld [vmem:[%s0 + $0x130] sm:$0xff]
  %v71 = vld [vmem:[%s0 + $0x138] sm:$0xff]
  %v72 = vld [vmem:[%s0 + $0x140] sm:$0xff]
  %v73 = vld [vmem:[%s0 + $0x148] sm:$0xff]
  %v74 = vld [vmem:[%s0 + $0x150] sm:$0xff]
  %v75 = vld [vmem:[%s0 + $0x158] sm:$0xff]
  %v76 = vld [vmem:[%s0 + $0x160] sm:$0xff]
  %v77 = vld [vmem:[%s0 + $0x168] sm:$0xff]
  %v78 = vld [vmem:[%s0 + $0x170] sm:$0xff]
  %v79 = vld [vmem:[%s0 + $0x178] sm:$0xff]
  %v80 = vld [vmem:[%s0 + $0x180] sm:$0xff]
  %v81 = vld [vmem:[%s0 + $0x188] sm:$0xff]
  %v82 = vld [vmem:[%s0 + $0x190] sm:$0xff]
  %v83 = vld [vmem:[%s0 + $0x198] sm:$0xff]
  %v84 = vld [vmem:[%s0 + $0x1a0] sm:$0xff]
  %v85 = vld [vmem:[%s0 + $0x1a8] sm:$0xff]
  %v86 = vld [vmem:[%s0 + $0x1b0] sm:$0xff]
  %v87 = vld [vmem:[%s0 + $0x1b8] sm:$0xff]
  %v88 = vld [vmem:[%s0 + $0x1c0] sm:$0xff]
  %v89 = vld [vmem:[%s0 + $0x1c8] sm:$0xff]
  %v90 = vld [vmem:[%s0 + $0x1d0] sm:$0xff]
  %v91 = vld [vmem:[%s0 + $0x1d8] sm:$0xff]
  %v92 = vld [vmem:[%s0 + $0x1e0] sm:$0xff]
  %v93 = vld [vmem:[%s0 + $0x1e8] sm:$0xff]
  %v94 = vld [vmem:[%s0 + $0x1f0] sm:$0xff]
  %v95 = vld [vmem:[%s0 + $0x1f8] sm:$0xff]
  %v96 = vld [vmem:[%s1] sm:$0xff]
  %v97 = vld [vmem:[%s1 + $0x8] sm:$0xff]
  %v98 = vld [vmem:[%s1 + $0x10] sm:$0xff]
  %v99 = vld [vmem:[%s1 + $0x18] sm:$0xff]
  %v100 = vld [vmem:[%s1 + $0x20] sm:$0xf]
  %v101 = vld [vmem:[%s2] sm:$0x1]
  %v103 = vlaneseq
  %v104 = vshrl.u32 %v103, 7
  %v105 = vsub.s32 0, %v104
  %v106 = vrot.slane %v101, %v105
  %vm108 = vcmask 293888
  %v110 = vsel %vm108, %v32, 0
  %v113 = vsel %vm108, %v33, 0
  %v116 = vsel %vm108, %v34, 0
  %v119 = vsel %vm108, %v35, 0
  %v122 = vsel %vm108, %v36, 0
  %v125 = vsel %vm108, %v37, 0
  %v128 = vsel %vm108, %v38, 0
  %v131 = vsel %vm108, %v39, 0
  %v134 = vsel %vm108, %v40, 0
  %v137 = vsel %vm108, %v41, 0
  %v140 = vsel %vm108, %v42, 0
  %v143 = vsel %vm108, %v43, 0
  %v146 = vsel %vm108, %v44, 0
  %v149 = vsel %vm108, %v45, 0
  %v152 = vsel %vm108, %v46, 0
  %v155 = vsel %vm108, %v47, 0
  %v158 = vsel %vm108, %v48, 0
  %v161 = vsel %vm108, %v49, 0
  %v164 = vsel %vm108, %v50, 0
  %v167 = vsel %vm108, %v51, 0
  %v170 = vsel %vm108, %v52, 0
  %v173 = vsel %vm108, %v53, 0
  %v176 = vsel %vm108, %v54, 0
  %v179 = vsel %vm108, %v55, 0
  %v182 = vsel %vm108, %v56, 0
  %v185 = vsel %vm108, %v57, 0
  %v188 = vsel %vm108, %v58, 0
  %v191 = vsel %vm108, %v59, 0
  %v194 = vsel %vm108, %v60, 0
  %v197 = vsel %vm108, %v61, 0
  %v200 = vsel %vm108, %v62, 0
  %v203 = vsel %vm108, %v63, 0
  %v206 = vsel %vm108, %v64, 0
  %v209 = vsel %vm108, %v65, 0
  %v212 = vsel %vm108, %v66, 0
  %v215 = vsel %vm108, %v67, 0
  %v218 = vsel %vm108, %v68, 0
  %v221 = vsel %vm108, %v69, 0
  %v224 = vsel %vm108, %v70, 0
  %v227 = vsel %vm108, %v71, 0
  %v230 = vsel %vm108, %v72, 0
  %v233 = vsel %vm108, %v73, 0
  %v236 = vsel %vm108, %v74, 0
  %v239 = vsel %vm108, %v75, 0
  %v242 = vsel %vm108, %v76, 0
  %v245 = vsel %vm108, %v77, 0
  %v248 = vsel %vm108, %v78, 0
  %v251 = vsel %vm108, %v79, 0
  %v254 = vsel %vm108, %v80, 0
  %v257 = vsel %vm108, %v81, 0
  %v260 = vsel %vm108, %v82, 0
  %v263 = vsel %vm108, %v83, 0
  %v266 = vsel %vm108, %v84, 0
  %v269 = vsel %vm108, %v85, 0
  %v272 = vsel %vm108, %v86, 0
  %v275 = vsel %vm108, %v87, 0
  %v278 = vsel %vm108, %v88, 0
  %v281 = vsel %vm108, %v89, 0
  %v284 = vsel %vm108, %v90, 0
  %v287 = vsel %vm108, %v91, 0
  %v290 = vsel %vm108, %v92, 0
  %v293 = vsel %vm108, %v93, 0
  %v296 = vsel %vm108, %v94, 0
  %v299 = vsel %vm108, %v95, 0
  %vm301 = vcmask 1043456
  %v303 = vsel %vm301, %v100, 0
  %305 = vmatprep.subr.mxu0 0.0
  %306 = vmatpush1.msra.mxu0 %v96
  %307 = vmatprep.subr.mxu0 0.0
  %308 = vmatpush1.msra.mxu0 %v97
  %309 = vmatprep.subr.mxu0 0.0
  %310 = vmatpush1.msra.mxu0 %v98
  %311 = vmatprep.subr.mxu0 0.0
  %312 = vmatpush1.msra.mxu0 %v99
  %313 = vmatprep.subr.mxu0 0.0
  %314 = vmatpush1.msra.mxu0 %v303
  %315 = vmatprep.subr.mxu0 0.0
  %316 = vmatpush1.msra.mxu0 0.0
  %317 = vmatprep.subr.mxu0 0.0
  %318 = vmatpush1.msra.mxu0 0.0
  %319 = vmatprep.subr.mxu0 0.0
  %320 = vmatpush1.msra.mxu0 0.0
  %321 = vmatprep.subr.mxu0 0.0
  %322 = vmatpush1.msra.mxu0 0.0
  %323 = vmatprep.subr.mxu0 0.0
  %324 = vmatpush1.msra.mxu0 0.0
  %325 = vmatprep.subr.mxu0 0.0
  %326 = vmatpush1.msra.mxu0 0.0
  %327 = vmatprep.subr.mxu0 0.0
  %328 = vmatpush1.msra.mxu0 0.0
  %329 = vmatprep.subr.mxu0 0.0
  %330 = vmatpush1.msra.mxu0 0.0
  %331 = vmatprep.subr.mxu0 0.0
  %332 = vmatpush1.msra.mxu0 0.0
  %333 = vmatprep.subr.mxu0 0.0
  %334 = vmatpush1.msra.mxu0 0.0
  %335 = vmatprep.subr.mxu0 0.0
  %336 = vmatpush1.msra.mxu0 0.0
  %337 = vmatprep.subr.mxu0 0.0
  %338 = vmatpush1.msra.mxu0 0.0
  %339 = vmatprep.subr.mxu0 0.0
  %340 = vmatpush1.msra.mxu0 0.0
  %341 = vmatprep.subr.mxu0 0.0
  %342 = vmatpush1.msra.mxu0 0.0
  %343 = vmatprep.subr.mxu0 0.0
  %344 = vmatpush1.msra.mxu0 0.0
  %345 = vmatprep.subr.mxu0 0.0
  %346 = vmatpush1.msra.mxu0 0.0
  %347 = vmatprep.subr.mxu0 0.0
  %348 = vmatpush1.msra.mxu0 0.0
  %349 = vmatprep.subr.mxu0 0.0
  %350 = vmatpush1.msra.mxu0 0.0
  %351 = vmatprep.subr.mxu0 0.0
  %352 = vmatpush1.msra.mxu0 0.0
  %353 = vmatprep.subr.mxu0 0.0
  %354 = vmatpush1.msra.mxu0 0.0
  %355 = vmatprep.subr.mxu0 0.0
  %356 = vmatpush1.msra.mxu0 0.0
  %357 = vmatprep.subr.mxu0 0.0
  %358 = vmatpush1.msra.mxu0 0.0
  %359 = vmatprep.subr.mxu0 0.0
  %360 = vmatpush1.msra.mxu0 0.0
  %361 = vmatprep.subr.mxu0 0.0
  %362 = vmatpush1.msra.mxu0 0.0
  %363 = vmatprep.subr.mxu0 0.0
  %364 = vmatpush1.msra.mxu0 0.0
  %365 = vmatprep.subr.mxu0 0.0
  %366 = vmatpush1.msra.mxu0 0.0
  %367 = vmatprep.subr.mxu0 0.0
  %368 = vmatpush1.msra.mxu0 0.0
  %369 = vmatprep.mubr.f32.mxu0 0.0
  %370 = vmatmul.mubr.f32.gmra.mrb[0].mxu0 %v110
  %v371 = vpop.f32.mrb[0].mxu0
  %v372 = vadd.f32 %v106, %v371
  %v373 = vpop.f32.mrb[0].mxu0
  %374 = vmatprep.mubr.f32.mxu0 0.0
  %375 = vmatmul.mubr.f32.gmra.mrb[0].mxu0 %v113
  %v376 = vpop.f32.mrb[0].mxu0
  %v377 = vadd.f32 %v106, %v376
  %v378 = vpop.f32.mrb[0].mxu0
  %379 = vmatprep.mubr.f32.mxu0 0.0
  %380 = vmatmul.mubr.f32.gmra.mrb[0].mxu0 %v116
  %v381 = vpop.f32.mrb[0].mxu0
  %v382 = vadd.f32 %v106, %v381
  %v383 = vpop.f32.mrb[0].mxu0
  %384 = vmatprep.mubr.f32.mxu0 0.0
  %385 = vmatmul.mubr.f32.gmra.mrb[0].mxu0 %v119
  %v386 = vpop.f32.mrb[0].mxu0
  %v387 = vadd.f32 %v106, %v386
  %v388 = vpop.f32.mrb[0].mxu0
  %389 = vmatprep.mubr.f32.mxu0 0.0
  %390 = vmatmul.mubr.f32.gmra.mrb[0].mxu0 %v122
  %v391 = vpop.f32.mrb[0].mxu0
  %v392 = vadd.f32 %v106, %v391
  %v393 = vpop.f32.mrb[0].mxu0
  %394 = vmatprep.mubr.f32.mxu0 0.0
  %395 = vmatmul.mubr.f32.gmra.mrb[0].mxu0 %v125
  %v396 = vpop.f32.mrb[0].mxu0
  %v397 = vadd.f32 %v106, %v396
  %v398 = vpop.f32.mrb[0].mxu0
  %399 = vmatprep.mubr.f32.mxu0 0.0
  %400 = vmatmul.mubr.f32.gmra.mrb[0].mxu0 %v128
  %v401 = vpop.f32.mrb[0].mxu0
  %v402 = vadd.f32 %v106, %v401
  %v403 = vpop.f32.mrb[0].mxu0
  %404 = vmatprep.mubr.f32.mxu0 0.0
  %405 = vmatmul.mubr.f32.gmra.mrb[0].mxu0 %v131
  %v406 = vpop.f32.mrb[0].mxu0
  %v407 = vadd.f32 %v106, %v406
  %v408 = vpop.f32.mrb[0].mxu0
  %409 = vmatprep.mubr.f32.mxu0 0.0
  %410 = vmatmul.mubr.f32.gmra.mrb[0].mxu0 %v134
  %v411 = vpop.f32.mrb[0].mxu0
  %v412 = vadd.f32 %v106, %v411
  %v413 = vpop.f32.mrb[0].mxu0
  %414 = vmatprep.mubr.f32.mxu0 0.0
  %415 = vmatmul.mubr.f32.gmra.mrb[0].mxu0 %v137
  %v416 = vpop.f32.mrb[0].mxu0
  %v417 = vadd.f32 %v106, %v416
  %v418 = vpop.f32.mrb[0].mxu0
  %419 = vmatprep.mubr.f32.mxu0 0.0
  %420 = vmatmul.mubr.f32.gmra.mrb[0].mxu0 %v140
  %v421 = vpop.f32.mrb[0].mxu0
  %v422 = vadd.f32 %v106, %v421
  %v423 = vpop.f32.mrb[0].mxu0
  %424 = vmatprep.mubr.f32.mxu0 0.0
  %425 = vmatmul.mubr.f32.gmra.mrb[0].mxu0 %v143
  %v426 = vpop.f32.mrb[0].mxu0
  %v427 = vadd.f32 %v106, %v426
  %v428 = vpop.f32.mrb[0].mxu0
  %429 = vmatprep.mubr.f32.mxu0 0.0
  %430 = vmatmul.mubr.f32.gmra.mrb[0].mxu0 %v146
  %v431 = vpop.f32.mrb[0].mxu0
  %v432 = vadd.f32 %v106, %v431
  %v433 = vpop.f32.mrb[0].mxu0
  %434 = vmatprep.mubr.f32.mxu0 0.0
  %435 = vmatmul.mubr.f32.gmra.mrb[0].mxu0 %v149
  %v436 = vpop.f32.mrb[0].mxu0
  %v437 = vadd.f32 %v106, %v436
  %v438 = vpop.f32.mrb[0].mxu0
  %439 = vmatprep.mubr.f32.mxu0 0.0
  %440 = vmatmul.mubr.f32.gmra.mrb[0].mxu0 %v152
  %v441 = vpop.f32.mrb[0].mxu0
  %v442 = vadd.f32 %v106, %v441
  %v443 = vpop.f32.mrb[0].mxu0
  %444 = vmatprep.mubr.f32.mxu0 0.0
  %445 = vmatmul.mubr.f32.gmra.mrb[0].mxu0 %v155
  %v446 = vpop.f32.mrb[0].mxu0
  %v447 = vadd.f32 %v106, %v446
  %v448 = vpop.f32.mrb[0].mxu0
  %449 = vmatprep.mubr.f32.mxu0 0.0
  %450 = vmatmul.mubr.f32.gmra.mrb[0].mxu0 %v158
  %v451 = vpop.f32.mrb[0].mxu0
  %v452 = vadd.f32 %v106, %v451
  %v453 = vpop.f32.mrb[0].mxu0
  %454 = vmatprep.mubr.f32.mxu0 0.0
  %455 = vmatmul.mubr.f32.gmra.mrb[0].mxu0 %v161
  %v456 = vpop.f32.mrb[0].mxu0
  %v457 = vadd.f32 %v106, %v456
  %v458 = vpop.f32.mrb[0].mxu0
  %459 = vmatprep.mubr.f32.mxu0 0.0
  %460 = vmatmul.mubr.f32.gmra.mrb[0].mxu0 %v164
  %v461 = vpop.f32.mrb[0].mxu0
  %v462 = vadd.f32 %v106, %v461
  %v463 = vpop.f32.mrb[0].mxu0
  %464 = vmatprep.mubr.f32.mxu0 0.0
  %465 = vmatmul.mubr.f32.gmra.mrb[0].mxu0 %v167
  %v466 = vpop.f32.mrb[0].mxu0
  %v467 = vadd.f32 %v106, %v466
  %v468 = vpop.f32.mrb[0].mxu0
  %469 = vmatprep.mubr.f32.mxu0 0.0
  %470 = vmatmul.mubr.f32.gmra.mrb[0].mxu0 %v170
  %v471 = vpop.f32.mrb[0].mxu0
  %v472 = vadd.f32 %v106, %v471
  %v473 = vpop.f32.mrb[0].mxu0
  %474 = vmatprep.mubr.f32.mxu0 0.0
  %475 = vmatmul.mubr.f32.gmra.mrb[0].mxu0 %v173
  %v476 = vpop.f32.mrb[0].mxu0
  %v477 = vadd.f32 %v106, %v476
  %v478 = vpop.f32.mrb[0].mxu0
  %479 = vmatprep.mubr.f32.mxu0 0.0
  %480 = vmatmul.mubr.f32.gmra.mrb[0].mxu0 %v176
  %v481 = vpop.f32.mrb[0].mxu0
  %v482 = vadd.f32 %v106, %v481
  %v483 = vpop.f32.mrb[0].mxu0
  %484 = vmatprep.mubr.f32.mxu0 0.0
  %485 = vmatmul.mubr.f32.gmra.mrb[0].mxu0 %v179
  %v486 = vpop.f32.mrb[0].mxu0
  %v487 = vadd.f32 %v106, %v486
  %v488 = vpop.f32.mrb[0].mxu0
  %489 = vmatprep.mubr.f32.mxu0 0.0
  %490 = vmatmul.mubr.f32.gmra.mrb[0].mxu0 %v182
  %v491 = vpop.f32.mrb[0].mxu0
  %v492 = vadd.f32 %v106, %v491
  %v493 = vpop.f32.mrb[0].mxu0
  %494 = vmatprep.mubr.f32.mxu0 0.0
  %495 = vmatmul.mubr.f32.gmra.mrb[0].mxu0 %v185
  %v496 = vpop.f32.mrb[0].mxu0
  %v497 = vadd.f32 %v106, %v496
  %v498 = vpop.f32.mrb[0].mxu0
  %499 = vmatprep.mubr.f32.mxu0 0.0
  %500 = vmatmul.mubr.f32.gmra.mrb[0].mxu0 %v188
  %v501 = vpop.f32.mrb[0].mxu0
  %v502 = vadd.f32 %v106, %v501
  %v503 = vpop.f32.mrb[0].mxu0
  %504 = vmatprep.mubr.f32.mxu0 0.0
  %505 = vmatmul.mubr.f32.gmra.mrb[0].mxu0 %v191
  %v506 = vpop.f32.mrb[0].mxu0
  %v507 = vadd.f32 %v106, %v506
  %v508 = vpop.f32.mrb[0].mxu0
  %509 = vmatprep.mubr.f32.mxu0 0.0
  %510 = vmatmul.mubr.f32.gmra.mrb[0].mxu0 %v194
  %v511 = vpop.f32.mrb[0].mxu0
  %v512 = vadd.f32 %v106, %v511
  %v513 = vpop.f32.mrb[0].mxu0
  %514 = vmatprep.mubr.f32.mxu0 0.0
  %515 = vmatmul.mubr.f32.gmra.mrb[0].mxu0 %v197
  %v516 = vpop.f32.mrb[0].mxu0
  %v517 = vadd.f32 %v106, %v516
  %v518 = vpop.f32.mrb[0].mxu0
  %519 = vmatprep.mubr.f32.mxu0 0.0
  %520 = vmatmul.mubr.f32.gmra.mrb[0].mxu0 %v200
  %v521 = vpop.f32.mrb[0].mxu0
  %v522 = vadd.f32 %v106, %v521
  %v523 = vpop.f32.mrb[0].mxu0
  %524 = vmatprep.mubr.f32.mxu0 0.0
  %525 = vmatmul.mubr.f32.gmra.mrb[0].mxu0 %v203
  %v526 = vpop.f32.mrb[0].mxu0
  %v527 = vadd.f32 %v106, %v526
  %v528 = vpop.f32.mrb[0].mxu0
  %529 = vmatprep.mubr.f32.mxu0 0.0
  %530 = vmatmul.mubr.f32.gmra.mrb[0].mxu0 %v206
  %v531 = vpop.f32.mrb[0].mxu0
  %v532 = vadd.f32 %v106, %v531
  %v533 = vpop.f32.mrb[0].mxu0
  %534 = vmatprep.mubr.f32.mxu0 0.0
  %535 = vmatmul.mubr.f32.gmra.mrb[0].mxu0 %v209
  %v536 = vpop.f32.mrb[0].mxu0
  %v537 = vadd.f32 %v106, %v536
  %v538 = vpop.f32.mrb[0].mxu0
  %539 = vmatprep.mubr.f32.mxu0 0.0
  %540 = vmatmul.mubr.f32.gmra.mrb[0].mxu0 %v212
  %v541 = vpop.f32.mrb[0].mxu0
  %v542 = vadd.f32 %v106, %v541
  %v543 = vpop.f32.mrb[0].mxu0
  %544 = vmatprep.mubr.f32.mxu0 0.0
  %545 = vmatmul.mubr.f32.gmra.mrb[0].mxu0 %v215
  %v546 = vpop.f32.mrb[0].mxu0
  %v547 = vadd.f32 %v106, %v546
  %v548 = vpop.f32.mrb[0].mxu0
  %549 = vmatprep.mubr.f32.mxu0 0.0
  %550 = vmatmul.mubr.f32.gmra.mrb[0].mxu0 %v218
  %v551 = vpop.f32.mrb[0].mxu0
  %v552 = vadd.f32 %v106, %v551
  %v553 = vpop.f32.mrb[0].mxu0
  %554 = vmatprep.mubr.f32.mxu0 0.0
  %555 = vmatmul.mubr.f32.gmra.mrb[0].mxu0 %v221
  %v556 = vpop.f32.mrb[0].mxu0
  %v557 = vadd.f32 %v106, %v556
  %v558 = vpop.f32.mrb[0].mxu0
  %559 = vmatprep.mubr.f32.mxu0 0.0
  %560 = vmatmul.mubr.f32.gmra.mrb[0].mxu0 %v224
  %v561 = vpop.f32.mrb[0].mxu0
  %v562 = vadd.f32 %v106, %v561
  %v563 = vpop.f32.mrb[0].mxu0
  %564 = vmatprep.mubr.f32.mxu0 0.0
  %565 = vmatmul.mubr.f32.gmra.mrb[0].mxu0 %v227
  %v566 = vpop.f32.mrb[0].mxu0
  %v567 = vadd.f32 %v106, %v566
  %v568 = vpop.f32.mrb[0].mxu0
  %569 = vmatprep.mubr.f32.mxu0 0.0
  %570 = vmatmul.mubr.f32.gmra.mrb[0].mxu0 %v230
  %v571 = vpop.f32.mrb[0].mxu0
  %v572 = vadd.f32 %v106, %v571
  %v573 = vpop.f32.mrb[0].mxu0
  %574 = vmatprep.mubr.f32.mxu0 0.0
  %575 = vmatmul.mubr.f32.gmra.mrb[0].mxu0 %v233
  %v576 = vpop.f32.mrb[0].mxu0
  %v577 = vadd.f32 %v106, %v576
  %v578 = vpop.f32.mrb[0].mxu0
  %579 = vmatprep.mubr.f32.mxu0 0.0
  %580 = vmatmul.mubr.f32.gmra.mrb[0].mxu0 %v236
  %v581 = vpop.f32.mrb[0].mxu0
  %v582 = vadd.f32 %v106, %v581
  %v583 = vpop.f32.mrb[0].mxu0
  %584 = vmatprep.mubr.f32.mxu0 0.0
  %585 = vmatmul.mubr.f32.gmra.mrb[0].mxu0 %v239
  %v586 = vpop.f32.mrb[0].mxu0
  %v587 = vadd.f32 %v106, %v586
  %v588 = vpop.f32.mrb[0].mxu0
  %589 = vmatprep.mubr.f32.mxu0 0.0
  %590 = vmatmul.mubr.f32.gmra.mrb[0].mxu0 %v242
  %v591 = vpop.f32.mrb[0].mxu0
  %v592 = vadd.f32 %v106, %v591
  %v593 = vpop.f32.mrb[0].mxu0
  %594 = vmatprep.mubr.f32.mxu0 0.0
  %595 = vmatmul.mubr.f32.gmra.mrb[0].mxu0 %v245
  %v596 = vpop.f32.mrb[0].mxu0
  %v597 = vadd.f32 %v106, %v596
  %v598 = vpop.f32.mrb[0].mxu0
  %599 = vmatprep.mubr.f32.mxu0 0.0
  %600 = vmatmul.mubr.f32.gmra.mrb[0].mxu0 %v248
  %v601 = vpop.f32.mrb[0].mxu0
  %v602 = vadd.f32 %v106, %v601
  %v603 = vpop.f32.mrb[0].mxu0
  %604 = vmatprep.mubr.f32.mxu0 0.0
  %605 = vmatmul.mubr.f32.gmra.mrb[0].mxu0 %v251
  %v606 = vpop.f32.mrb[0].mxu0
  %v607 = vadd.f32 %v106, %v606
  %v608 = vpop.f32.mrb[0].mxu0
  %609 = vmatprep.mubr.f32.mxu0 0.0
  %610 = vmatmul.mubr.f32.gmra.mrb[0].mxu0 %v254
  %v611 = vpop.f32.mrb[0].mxu0
  %v612 = vadd.f32 %v106, %v611
  %v613 = vpop.f32.mrb[0].mxu0
  %614 = vmatprep.mubr.f32.mxu0 0.0
  %615 = vmatmul.mubr.f32.gmra.mrb[0].mxu0 %v257
  %v616 = vpop.f32.mrb[0].mxu0
  %v617 = vadd.f32 %v106, %v616
  %v618 = vpop.f32.mrb[0].mxu0
  %619 = vmatprep.mubr.f32.mxu0 0.0
  %620 = vmatmul.mubr.f32.gmra.mrb[0].mxu0 %v260
  %v621 = vpop.f32.mrb[0].mxu0
  %v622 = vadd.f32 %v106, %v621
  %v623 = vpop.f32.mrb[0].mxu0
  %624 = vmatprep.mubr.f32.mxu0 0.0
  %625 = vmatmul.mubr.f32.gmra.mrb[0].mxu0 %v263
  %v626 = vpop.f32.mrb[0].mxu0
  %v627 = vadd.f32 %v106, %v626
  %v628 = vpop.f32.mrb[0].mxu0
  %629 = vmatprep.mubr.f32.mxu0 0.0
  %630 = vmatmul.mubr.f32.gmra.mrb[0].mxu0 %v266
  %v631 = vpop.f32.mrb[0].mxu0
  %v632 = vadd.f32 %v106, %v631
  %v633 = vpop.f32.mrb[0].mxu0
  %634 = vmatprep.mubr.f32.mxu0 0.0
  %635 = vmatmul.mubr.f32.gmra.mrb[0].mxu0 %v269
  %v636 = vpop.f32.mrb[0].mxu0
  %v637 = vadd.f32 %v106, %v636
  %v638 = vpop.f32.mrb[0].mxu0
  %639 = vmatprep.mubr.f32.mxu0 0.0
  %640 = vmatmul.mubr.f32.gmra.mrb[0].mxu0 %v272
  %v641 = vpop.f32.mrb[0].mxu0
  %v642 = vadd.f32 %v106, %v641
  %v643 = vpop.f32.mrb[0].mxu0
  %644 = vmatprep.mubr.f32.mxu0 0.0
  %645 = vmatmul.mubr.f32.gmra.mrb[0].mxu0 %v275
  %v646 = vpop.f32.mrb[0].mxu0
  %v647 = vadd.f32 %v106, %v646
  %v648 = vpop.f32.mrb[0].mxu0
  %649 = vmatprep.mubr.f32.mxu0 0.0
  %650 = vmatmul.mubr.f32.gmra.mrb[0].mxu0 %v278
  %v651 = vpop.f32.mrb[0].mxu0
  %v652 = vadd.f32 %v106, %v651
  %v653 = vpop.f32.mrb[0].mxu0
  %654 = vmatprep.mubr.f32.mxu0 0.0
  %655 = vmatmul.mubr.f32.gmra.mrb[0].mxu0 %v281
  %v656 = vpop.f32.mrb[0].mxu0
  %v657 = vadd.f32 %v106, %v656
  %v658 = vpop.f32.mrb[0].mxu0
  %659 = vmatprep.mubr.f32.mxu0 0.0
  %660 = vmatmul.mubr.f32.gmra.mrb[0].mxu0 %v284
  %v661 = vpop.f32.mrb[0].mxu0
  %v662 = vadd.f32 %v106, %v661
  %v663 = vpop.f32.mrb[0].mxu0
  %664 = vmatprep.mubr.f32.mxu0 0.0
  %665 = vmatmul.mubr.f32.gmra.mrb[0].mxu0 %v287
  %v666 = vpop.f32.mrb[0].mxu0
  %v667 = vadd.f32 %v106, %v666
  %v668 = vpop.f32.mrb[0].mxu0
  %669 = vmatprep.mubr.f32.mxu0 0.0
  %670 = vmatmul.mubr.f32.gmra.mrb[0].mxu0 %v290
  %v671 = vpop.f32.mrb[0].mxu0
  %v672 = vadd.f32 %v106, %v671
  %v673 = vpop.f32.mrb[0].mxu0
  %674 = vmatprep.mubr.f32.mxu0 0.0
  %675 = vmatmul.mubr.f32.gmra.mrb[0].mxu0 %v293
  %v676 = vpop.f32.mrb[0].mxu0
  %v677 = vadd.f32 %v106, %v676
  %v678 = vpop.f32.mrb[0].mxu0
  %679 = vmatprep.mubr.f32.mxu0 0.0
  %680 = vmatmul.mubr.f32.gmra.mrb[0].mxu0 %v296
  %v681 = vpop.f32.mrb[0].mxu0
  %v682 = vadd.f32 %v106, %v681
  %v683 = vpop.f32.mrb[0].mxu0
  %684 = vmatprep.mubr.f32.mxu0 0.0
  %685 = vmatmul.mubr.f32.gmra.mrb[0].mxu0 %v299
  %v686 = vpop.f32.mrb[0].mxu0
  %v687 = vadd.f32 %v106, %v686
  %v688 = vpop.f32.mrb[0].mxu0
  %689 = vdwg.mxu0
  %v690 = vmax.f32 %v372, 0.0
  %v691 = vmax.f32 %v377, 0.0
  %v692 = vmax.f32 %v382, 0.0
  %v693 = vmax.f32 %v387, 0.0
  %v694 = vmax.f32 %v392, 0.0
  %v695 = vmax.f32 %v397, 0.0
  %v696 = vmax.f32 %v402, 0.0
  %v697 = vmax.f32 %v407, 0.0
  %v698 = vmax.f32 %v412, 0.0
  %v699 = vmax.f32 %v417, 0.0
  %v700 = vmax.f32 %v422, 0.0
  %v701 = vmax.f32 %v427, 0.0
  %v702 = vmax.f32 %v432, 0.0
  %v703 = vmax.f32 %v437, 0.0
  %v704 = vmax.f32 %v442, 0.0
  %v705 = vmax.f32 %v447, 0.0
  %v706 = vmax.f32 %v452, 0.0
  %v707 = vmax.f32 %v457, 0.0
  %v708 = vmax.f32 %v462, 0.0
  %v709 = vmax.f32 %v467, 0.0
  %v710 = vmax.f32 %v472, 0.0
  %v711 = vmax.f32 %v477, 0.0
  %v712 = vmax.f32 %v482, 0.0
  %v713 = vmax.f32 %v487, 0.0
  %v714 = vmax.f32 %v492, 0.0
  %v715 = vmax.f32 %v497, 0.0
  %v716 = vmax.f32 %v502, 0.0
  %v717 = vmax.f32 %v507, 0.0
  %v718 = vmax.f32 %v512, 0.0
  %v719 = vmax.f32 %v517, 0.0
  %v720 = vmax.f32 %v522, 0.0
  %v721 = vmax.f32 %v527, 0.0
  %v722 = vmax.f32 %v532, 0.0
  %v723 = vmax.f32 %v537, 0.0
  %v724 = vmax.f32 %v542, 0.0
  %v725 = vmax.f32 %v547, 0.0
  %v726 = vmax.f32 %v552, 0.0
  %v727 = vmax.f32 %v557, 0.0
  %v728 = vmax.f32 %v562, 0.0
  %v729 = vmax.f32 %v567, 0.0
  %v730 = vmax.f32 %v572, 0.0
  %v731 = vmax.f32 %v577, 0.0
  %v732 = vmax.f32 %v582, 0.0
  %v733 = vmax.f32 %v587, 0.0
  %v734 = vmax.f32 %v592, 0.0
  %v735 = vmax.f32 %v597, 0.0
  %v736 = vmax.f32 %v602, 0.0
  %v737 = vmax.f32 %v607, 0.0
  %v738 = vmax.f32 %v612, 0.0
  %v739 = vmax.f32 %v617, 0.0
  %v740 = vmax.f32 %v622, 0.0
  %v741 = vmax.f32 %v627, 0.0
  %v742 = vmax.f32 %v632, 0.0
  %v743 = vmax.f32 %v637, 0.0
  %v744 = vmax.f32 %v642, 0.0
  %v745 = vmax.f32 %v647, 0.0
  %v746 = vmax.f32 %v652, 0.0
  %v747 = vmax.f32 %v657, 0.0
  %v748 = vmax.f32 %v662, 0.0
  %v749 = vmax.f32 %v667, 0.0
  %v750 = vmax.f32 %v672, 0.0
  %v751 = vmax.f32 %v677, 0.0
  %v752 = vmax.f32 %v682, 0.0
  %v753 = vmax.f32 %v687, 0.0
  %v754 = vld [vmem:[%s3] sm:$0xff]
  %v756 = vcombine.high %v754, %v754
  %v758 = vunpack.c.l.s4 1983009808
  %v759 = vunpack.c.0.s8 %v758
  %v760 = vlaneseq
  %v761 = vshrl.u32 %v760, 7
  %v762 = vsub.s32 %v759, %v761
  %v763 = vrot.slane %v754, %v762
  %v765 = vunpack.c.l.s4 1983009808
  %v766 = vunpack.c.0.s8 %v765
  %v767 = vlaneseq
  %v768 = vshrl.u32 %v767, 7
  %v769 = vsub.s32 %v766, %v768
  %v770 = vrot.slane %v756, %v769
  %v771 = vcombine.high %v763, %v763
  %v772 = vcombine.high %v770, %v770
  %777 = vmatprep.subr.mxu0 0.0
  %778 = vmatpush1.msra.mxu0 %v690
  %779 = vmatprep.subr.mxu0 0.0
  %780 = vmatpush1.msra.mxu0 %v691
  %781 = vmatprep.subr.mxu0 0.0
  %782 = vmatpush1.msra.mxu0 %v692
  %783 = vmatprep.subr.mxu0 0.0
  %784 = vmatpush1.msra.mxu0 %v693
  %785 = vmatprep.subr.mxu0 0.0
  %786 = vmatpush1.msra.mxu0 %v694
  %787 = vmatprep.subr.mxu0 0.0
  %788 = vmatpush1.msra.mxu0 %v695
  %789 = vmatprep.subr.mxu0 0.0
  %790 = vmatpush1.msra.mxu0 %v696
  %791 = vmatprep.subr.mxu0 0.0
  %792 = vmatpush1.msra.mxu0 %v697
  %793 = vmatprep.subr.mxu0 0.0
  %794 = vmatpush1.msra.mxu0 %v698
  %795 = vmatprep.subr.mxu0 0.0
  %796 = vmatpush1.msra.mxu0 %v699
  %797 = vmatprep.subr.mxu0 0.0
  %798 = vmatpush1.msra.mxu0 %v700
  %799 = vmatprep.subr.mxu0 0.0
  %800 = vmatpush1.msra.mxu0 %v701
  %801 = vmatprep.subr.mxu0 0.0
  %802 = vmatpush1.msra.mxu0 %v702
  %803 = vmatprep.subr.mxu0 0.0
  %804 = vmatpush1.msra.mxu0 %v703
  %805 = vmatprep.subr.mxu0 0.0
  %806 = vmatpush1.msra.mxu0 %v704
  %807 = vmatprep.subr.mxu0 0.0
  %808 = vmatpush1.msra.mxu0 %v705
  %809 = vmatprep.subr.mxu0 0.0
  %810 = vmatpush1.msra.mxu0 %v706
  %811 = vmatprep.subr.mxu0 0.0
  %812 = vmatpush1.msra.mxu0 %v707
  %813 = vmatprep.subr.mxu0 0.0
  %814 = vmatpush1.msra.mxu0 %v708
  %815 = vmatprep.subr.mxu0 0.0
  %816 = vmatpush1.msra.mxu0 %v709
  %817 = vmatprep.subr.mxu0 0.0
  %818 = vmatpush1.msra.mxu0 %v710
  %819 = vmatprep.subr.mxu0 0.0
  %820 = vmatpush1.msra.mxu0 %v711
  %821 = vmatprep.subr.mxu0 0.0
  %822 = vmatpush1.msra.mxu0 %v712
  %823 = vmatprep.subr.mxu0 0.0
  %824 = vmatpush1.msra.mxu0 %v713
  %825 = vmatprep.subr.mxu0 0.0
  %826 = vmatpush1.msra.mxu0 %v714
  %827 = vmatprep.subr.mxu0 0.0
  %828 = vmatpush1.msra.mxu0 %v715
  %829 = vmatprep.subr.mxu0 0.0
  %830 = vmatpush1.msra.mxu0 %v716
  %831 = vmatprep.subr.mxu0 0.0
  %832 = vmatpush1.msra.mxu0 %v717
  %833 = vmatprep.subr.mxu0 0.0
  %834 = vmatpush1.msra.mxu0 %v718
  %835 = vmatprep.subr.mxu0 0.0
  %836 = vmatpush1.msra.mxu0 %v719
  %837 = vmatprep.subr.mxu0 0.0
  %838 = vmatpush1.msra.mxu0 %v720
  %839 = vmatprep.subr.mxu0 0.0
  %840 = vmatpush1.msra.mxu0 %v721
  %841 = vmatprep.mubr.f32.mxu0 %v771
  %842 = vmatmul.mubr.f32.gmra.mrb[0].mxu0 %v763
  %v843 = vpop.f32.mrb[0].mxu0
  %v844 = vadd.f32 0.0, %v843
  %v845 = vpop.f32.mrb[0].mxu0
  %846 = vdwg.mxu0
  %847 = vmatprep.subr.mxu0 0.0
  %848 = vmatpush1.msra.mxu0 %v722
  %849 = vmatprep.subr.mxu0 0.0
  %850 = vmatpush1.msra.mxu0 %v723
  %851 = vmatprep.subr.mxu0 0.0
  %852 = vmatpush1.msra.mxu0 %v724
  %853 = vmatprep.subr.mxu0 0.0
  %854 = vmatpush1.msra.mxu0 %v725
  %855 = vmatprep.subr.mxu0 0.0
  %856 = vmatpush1.msra.mxu0 %v726
  %857 = vmatprep.subr.mxu0 0.0
  %858 = vmatpush1.msra.mxu0 %v727
  %859 = vmatprep.subr.mxu0 0.0
  %860 = vmatpush1.msra.mxu0 %v728
  %861 = vmatprep.subr.mxu0 0.0
  %862 = vmatpush1.msra.mxu0 %v729
  %863 = vmatprep.subr.mxu0 0.0
  %864 = vmatpush1.msra.mxu0 %v730
  %865 = vmatprep.subr.mxu0 0.0
  %866 = vmatpush1.msra.mxu0 %v731
  %867 = vmatprep.subr.mxu0 0.0
  %868 = vmatpush1.msra.mxu0 %v732
  %869 = vmatprep.subr.mxu0 0.0
  %870 = vmatpush1.msra.mxu0 %v733
  %871 = vmatprep.subr.mxu0 0.0
  %872 = vmatpush1.msra.mxu0 %v734
  %873 = vmatprep.subr.mxu0 0.0
  %874 = vmatpush1.msra.mxu0 %v735
  %875 = vmatprep.subr.mxu0 0.0
  %876 = vmatpush1.msra.mxu0 %v736
  %877 = vmatprep.subr.mxu0 0.0
  %878 = vmatpush1.msra.mxu0 %v737
  %879 = vmatprep.subr.mxu0 0.0
  %880 = vmatpush1.msra.mxu0 %v738
  %881 = vmatprep.subr.mxu0 0.0
  %882 = vmatpush1.msra.mxu0 %v739
  %883 = vmatprep.subr.mxu0 0.0
  %884 = vmatpush1.msra.mxu0 %v740
  %885 = vmatprep.subr.mxu0 0.0
  %886 = vmatpush1.msra.mxu0 %v741
  %887 = vmatprep.subr.mxu0 0.0
  %888 = vmatpush1.msra.mxu0 %v742
  %889 = vmatprep.subr.mxu0 0.0
  %890 = vmatpush1.msra.mxu0 %v743
  %891 = vmatprep.subr.mxu0 0.0
  %892 = vmatpush1.msra.mxu0 %v744
  %893 = vmatprep.subr.mxu0 0.0
  %894 = vmatpush1.msra.mxu0 %v745
  %895 = vmatprep.subr.mxu0 0.0
  %896 = vmatpush1.msra.mxu0 %v746
  %897 = vmatprep.subr.mxu0 0.0
  %898 = vmatpush1.msra.mxu0 %v747
  %899 = vmatprep.subr.mxu0 0.0
  %900 = vmatpush1.msra.mxu0 %v748
  %901 = vmatprep.subr.mxu0 0.0
  %902 = vmatpush1.msra.mxu0 %v749
  %903 = vmatprep.subr.mxu0 0.0
  %904 = vmatpush1.msra.mxu0 %v750
  %905 = vmatprep.subr.mxu0 0.0
  %906 = vmatpush1.msra.mxu0 %v751
  %907 = vmatprep.subr.mxu0 0.0
  %908 = vmatpush1.msra.mxu0 %v752
  %909 = vmatprep.subr.mxu0 0.0
  %910 = vmatpush1.msra.mxu0 %v753
  %911 = vmatprep.mubr.f32.mxu0 %v772
  %912 = vmatmul.mubr.f32.gmra.mrb[0].mxu0 %v770
  %v913 = vpop.f32.mrb[0].mxu0
  %v914 = vadd.f32 %v844, %v913
  %v915 = vpop.f32.mrb[0].mxu0
  %916 = vdwg.mxu0
  %v917 = vld [vmem:[%s5] sm:$0x3]
  %v918 = vld [vmem:[%s4] sm:$0xff]
  %v919 = vld [vmem:[%s4 + $0x8] sm:$0xff]
  %vm920 = vcmask 130048
  %v922 = vsel %vm920, %v917, 0
  %924 = vmatprep.subr.mxu0 0.0
  %925 = vmatpush1.msra.mxu0 %v918
  %926 = vmatprep.subr.mxu0 0.0
  %927 = vmatpush1.msra.mxu0 %v919
  %928 = vmatprep.subr.mxu0 0.0
  %929 = vmatpush1.msra.mxu0 0.0
  %930 = vmatprep.subr.mxu0 0.0
  %931 = vmatpush1.msra.mxu0 0.0
  %932 = vmatprep.subr.mxu0 0.0
  %933 = vmatpush1.msra.mxu0 0.0
  %934 = vmatprep.subr.mxu0 0.0
  %935 = vmatpush1.msra.mxu0 0.0
  %936 = vmatprep.subr.mxu0 0.0
  %937 = vmatpush1.msra.mxu0 0.0
  %938 = vmatprep.subr.mxu0 0.0
  %939 = vmatpush1.msra.mxu0 0.0
  %940 = vmatprep.subr.mxu0 0.0
  %941 = vmatpush1.msra.mxu0 0.0
  %942 = vmatprep.subr.mxu0 0.0
  %943 = vmatpush1.msra.mxu0 0.0
  %944 = vmatprep.subr.mxu0 0.0
  %945 = vmatpush1.msra.mxu0 0.0
  %946 = vmatprep.subr.mxu0 0.0
  %947 = vmatpush1.msra.mxu0 0.0
  %948 = vmatprep.subr.mxu0 0.0
  %949 = vmatpush1.msra.mxu0 0.0
  %950 = vmatprep.subr.mxu0 0.0
  %951 = vmatpush1.msra.mxu0 0.0
  %952 = vmatprep.subr.mxu0 0.0
  %953 = vmatpush1.msra.mxu0 0.0
  %954 = vmatprep.subr.mxu0 0.0
  %955 = vmatpush1.msra.mxu0 0.0
  %956 = vmatprep.subr.mxu0 0.0
  %957 = vmatpush1.msra.mxu0 0.0
  %958 = vmatprep.subr.mxu0 0.0
  %959 = vmatpush1.msra.mxu0 0.0
  %960 = vmatprep.subr.mxu0 0.0
  %961 = vmatpush1.msra.mxu0 0.0
  %962 = vmatprep.subr.mxu0 0.0
  %963 = vmatpush1.msra.mxu0 0.0
  %964 = vmatprep.subr.mxu0 0.0
  %965 = vmatpush1.msra.mxu0 0.0
  %966 = vmatprep.subr.mxu0 0.0
  %967 = vmatpush1.msra.mxu0 0.0
  %968 = vmatprep.subr.mxu0 0.0
  %969 = vmatpush1.msra.mxu0 0.0
  %970 = vmatprep.subr.mxu0 0.0
  %971 = vmatpush1.msra.mxu0 0.0
  %972 = vmatprep.subr.mxu0 0.0
  %973 = vmatpush1.msra.mxu0 0.0
  %974 = vmatprep.subr.mxu0 0.0
  %975 = vmatpush1.msra.mxu0 0.0
  %976 = vmatprep.subr.mxu0 0.0
  %977 = vmatpush1.msra.mxu0 0.0
  %978 = vmatprep.subr.mxu0 0.0
  %979 = vmatpush1.msra.mxu0 0.0
  %980 = vmatprep.subr.mxu0 0.0
  %981 = vmatpush1.msra.mxu0 0.0
  %982 = vmatprep.subr.mxu0 0.0
  %983 = vmatpush1.msra.mxu0 0.0
  %984 = vmatprep.subr.mxu0 0.0
  %985 = vmatpush1.msra.mxu0 0.0
  %986 = vmatprep.subr.mxu0 0.0
  %987 = vmatpush1.msra.mxu0 0.0
  %988 = vmatprep.mubr.f32.mxu0 0.0
  %989 = vmatmul.mubr.f32.gmra.mrb[0].mxu0 %v922
  %v990 = vpop.f32.mrb[0].mxu0
  %v991 = vadd.f32 0.0, %v990
  %v992 = vpop.f32.mrb[0].mxu0
  %993 = vdwg.mxu0
  %v994 = vld [vmem:[%s6] sm:$0xff]
  %v995 = vld [vmem:[%s7] sm:$0xff]
  %v996 = vld [vmem:[%s7 + $0x8] sm:$0xff]
  %v997 = vld [vmem:[%s7 + $0x10] sm:$0xff]
  %v998 = vld [vmem:[%s7 + $0x18] sm:$0xff]
  %vm999 = vcmask 261120
  %v1001 = vsel %vm999, %v991, 0
  %1003 = vmatprep.subr.mxu0 0.0
  %1004 = vmatpush1.msra.mxu0 %v995
  %1005 = vmatprep.subr.mxu0 0.0
  %1006 = vmatpush1.msra.mxu0 %v996
  %1007 = vmatprep.subr.mxu0 0.0
  %1008 = vmatpush1.msra.mxu0 %v997
  %1009 = vmatprep.subr.mxu0 0.0
  %1010 = vmatpush1.msra.mxu0 %v998
  %1011 = vmatprep.subr.mxu0 0.0
  %1012 = vmatpush1.msra.mxu0 0.0
  %1013 = vmatprep.subr.mxu0 0.0
  %1014 = vmatpush1.msra.mxu0 0.0
  %1015 = vmatprep.subr.mxu0 0.0
  %1016 = vmatpush1.msra.mxu0 0.0
  %1017 = vmatprep.subr.mxu0 0.0
  %1018 = vmatpush1.msra.mxu0 0.0
  %1019 = vmatprep.subr.mxu0 0.0
  %1020 = vmatpush1.msra.mxu0 0.0
  %1021 = vmatprep.subr.mxu0 0.0
  %1022 = vmatpush1.msra.mxu0 0.0
  %1023 = vmatprep.subr.mxu0 0.0
  %1024 = vmatpush1.msra.mxu0 0.0
  %1025 = vmatprep.subr.mxu0 0.0
  %1026 = vmatpush1.msra.mxu0 0.0
  %1027 = vmatprep.subr.mxu0 0.0
  %1028 = vmatpush1.msra.mxu0 0.0
  %1029 = vmatprep.subr.mxu0 0.0
  %1030 = vmatpush1.msra.mxu0 0.0
  %1031 = vmatprep.subr.mxu0 0.0
  %1032 = vmatpush1.msra.mxu0 0.0
  %1033 = vmatprep.subr.mxu0 0.0
  %1034 = vmatpush1.msra.mxu0 0.0
  %1035 = vmatprep.subr.mxu0 0.0
  %1036 = vmatpush1.msra.mxu0 0.0
  %1037 = vmatprep.subr.mxu0 0.0
  %1038 = vmatpush1.msra.mxu0 0.0
  %1039 = vmatprep.subr.mxu0 0.0
  %1040 = vmatpush1.msra.mxu0 0.0
  %1041 = vmatprep.subr.mxu0 0.0
  %1042 = vmatpush1.msra.mxu0 0.0
  %1043 = vmatprep.subr.mxu0 0.0
  %1044 = vmatpush1.msra.mxu0 0.0
  %1045 = vmatprep.subr.mxu0 0.0
  %1046 = vmatpush1.msra.mxu0 0.0
  %1047 = vmatprep.subr.mxu0 0.0
  %1048 = vmatpush1.msra.mxu0 0.0
  %1049 = vmatprep.subr.mxu0 0.0
  %1050 = vmatpush1.msra.mxu0 0.0
  %1051 = vmatprep.subr.mxu0 0.0
  %1052 = vmatpush1.msra.mxu0 0.0
  %1053 = vmatprep.subr.mxu0 0.0
  %1054 = vmatpush1.msra.mxu0 0.0
  %1055 = vmatprep.subr.mxu0 0.0
  %1056 = vmatpush1.msra.mxu0 0.0
  %1057 = vmatprep.subr.mxu0 0.0
  %1058 = vmatpush1.msra.mxu0 0.0
  %1059 = vmatprep.subr.mxu0 0.0
  %1060 = vmatpush1.msra.mxu0 0.0
  %1061 = vmatprep.subr.mxu0 0.0
  %1062 = vmatpush1.msra.mxu0 0.0
  %1063 = vmatprep.subr.mxu0 0.0
  %1064 = vmatpush1.msra.mxu0 0.0
  %1065 = vmatprep.subr.mxu0 0.0
  %1066 = vmatpush1.msra.mxu0 0.0
  %1067 = vmatprep.mubr.f32.mxu0 0.0
  %1068 = vmatmul.mubr.f32.gmra.mrb[0].mxu0 %v1001
  %v1069 = vpop.f32.mrb[0].mxu0
  %v1070 = vadd.f32 0.0, %v1069
  %v1071 = vpop.f32.mrb[0].mxu0
  %1072 = vdwg.mxu0
  %vm1073 = vcmask 64512
  %v1075 = vsel %vm1073, %v914, 0
  %1077 = vmatprep.subr.mxu0 0.0
  %1078 = vmatpush1.msra.mxu0 %v994
  %1079 = vmatprep.subr.mxu0 0.0
  %1080 = vmatpush1.msra.mxu0 0.0
  %1081 = vmatprep.subr.mxu0 0.0
  %1082 = vmatpush1.msra.mxu0 0.0
  %1083 = vmatprep.subr.mxu0 0.0
  %1084 = vmatpush1.msra.mxu0 0.0
  %1085 = vmatprep.subr.mxu0 0.0
  %1086 = vmatpush1.msra.mxu0 0.0
  %1087 = vmatprep.subr.mxu0 0.0
  %1088 = vmatpush1.msra.mxu0 0.0
  %1089 = vmatprep.subr.mxu0 0.0
  %1090 = vmatpush1.msra.mxu0 0.0
  %1091 = vmatprep.subr.mxu0 0.0
  %1092 = vmatpush1.msra.mxu0 0.0
  %1093 = vmatprep.subr.mxu0 0.0
  %1094 = vmatpush1.msra.mxu0 0.0
  %1095 = vmatprep.subr.mxu0 0.0
  %1096 = vmatpush1.msra.mxu0 0.0
  %1097 = vmatprep.subr.mxu0 0.0
  %1098 = vmatpush1.msra.mxu0 0.0
  %1099 = vmatprep.subr.mxu0 0.0
  %1100 = vmatpush1.msra.mxu0 0.0
  %1101 = vmatprep.subr.mxu0 0.0
  %1102 = vmatpush1.msra.mxu0 0.0
  %1103 = vmatprep.subr.mxu0 0.0
  %1104 = vmatpush1.msra.mxu0 0.0
  %1105 = vmatprep.subr.mxu0 0.0
  %1106 = vmatpush1.msra.mxu0 0.0
  %1107 = vmatprep.subr.mxu0 0.0
  %1108 = vmatpush1.msra.mxu0 0.0
  %1109 = vmatprep.subr.mxu0 0.0
  %1110 = vmatpush1.msra.mxu0 0.0
  %1111 = vmatprep.subr.mxu0 0.0
  %1112 = vmatpush1.msra.mxu0 0.0
  %1113 = vmatprep.subr.mxu0 0.0
  %1114 = vmatpush1.msra.mxu0 0.0
  %1115 = vmatprep.subr.mxu0 0.0
  %1116 = vmatpush1.msra.mxu0 0.0
  %1117 = vmatprep.subr.mxu0 0.0
  %1118 = vmatpush1.msra.mxu0 0.0
  %1119 = vmatprep.subr.mxu0 0.0
  %1120 = vmatpush1.msra.mxu0 0.0
  %1121 = vmatprep.subr.mxu0 0.0
  %1122 = vmatpush1.msra.mxu0 0.0
  %1123 = vmatprep.subr.mxu0 0.0
  %1124 = vmatpush1.msra.mxu0 0.0
  %1125 = vmatprep.subr.mxu0 0.0
  %1126 = vmatpush1.msra.mxu0 0.0
  %1127 = vmatprep.subr.mxu0 0.0
  %1128 = vmatpush1.msra.mxu0 0.0
  %1129 = vmatprep.subr.mxu0 0.0
  %1130 = vmatpush1.msra.mxu0 0.0
  %1131 = vmatprep.subr.mxu0 0.0
  %1132 = vmatpush1.msra.mxu0 0.0
  %1133 = vmatprep.subr.mxu0 0.0
  %1134 = vmatpush1.msra.mxu0 0.0
  %1135 = vmatprep.subr.mxu0 0.0
  %1136 = vmatpush1.msra.mxu0 0.0
  %1137 = vmatprep.subr.mxu0 0.0
  %1138 = vmatpush1.msra.mxu0 0.0
  %1139 = vmatprep.subr.mxu0 0.0
  %1140 = vmatpush1.msra.mxu0 0.0
  %1141 = vmatprep.mubr.f32.mxu0 0.0
  %1142 = vmatmul.mubr.f32.gmra.mrb[0].mxu0 %v1075
  %v1143 = vpop.f32.mrb[0].mxu0
  %v1144 = vadd.f32 %v1070, %v1143
  %v1145 = vpop.f32.mrb[0].mxu0
  %1146 = vdwg.mxu0
  %v1147 = vld [vmem:[%s8] sm:$0x1]
  %v1149 = vlaneseq
  %v1150 = vshrl.u32 %v1149, 7
  %v1151 = vsub.s32 0, %v1150
  %v1152 = vrot.slane %v1147, %v1151
  %v1154 = vadd.f32 %v1144, %v1152
  %1155 = vst [vmem:[%s9] sm:$0x3] %v1154
  // Predicated region
  $region38: #{combined_model_forward.1} parent=0 // pred_check
    _
  $region39: #{combined_model_forward.1} parent=0 // pred_check_branch
    %1157 = sbr.rel (0) target = $region41
  $region40: #{combined_model_forward.1} parent=0 // pred_region
    _
  $region41: #{combined_model_forward.1} parent=0 // pred_fallthru
    _
  // Predicated region
  $region42: #{combined_model_forward.1} parent=0 // pred_check
    _
  $region43: #{combined_model_forward.1} parent=0 // pred_check_branch
    %1159 = sbr.rel (0) target = $region45
  $region44: #{combined_model_forward.1} parent=0 // pred_region
    _
  $region45: #{combined_model_forward.1} parent=0 // pred_fallthru
    _

</llo_original>
